<compile_context>
chip_gen: v6e
topology: v6e:2x2x1
jax: 0.10.0
libtpu: 0.0.40
codegen_flags: <defaults>
</compile_context>

<pallas_src>
import functools

import jax
import jax.numpy as jnp
from jax.experimental import pallas as pl
from jax.experimental.pallas import tpu as pltpu

NEG_SLOPE = 0.01  # nn.LeakyReLU default negative_slope


def _leaky(v):
    return jnp.where(v > 0, v, NEG_SLOPE * v)


def _dwconv_kernel(x_ref, wdw_ref, bdw_ref, wpw_ref, bpw_ref, o_ref, *, Wp, Npad):
    # x_ref  : (Cin,  Npad) f32 — zero-padded input, flattened Hp*Wp + lane pad
    # wdw_ref: (9, Cin, 1)  f32 — depthwise 3x3 weights, tap-major (dy, dx)
    # bdw_ref: (Cin, 1)     f32
    # wpw_ref: (Cout, Cin)  bf16 — pointwise 1x1 weights
    # bpw_ref: (Cout, 1)    f32
    # o_ref  : (Cout, Npad) f32 — padded-grid output; border lanes hold garbage
    #                             that the wrapper crops.
    x = x_ref[...]

    # ---- depthwise 3x3 (stride 1, pad 1): 9 lane-rolled multiply-accumulates.
    acc = x * wdw_ref[4]                        # centre tap (dy=0, dx=0)
    t = 0
    for dy in (-1, 0, 1):
        for dx in (-1, 0, 1):
            if not (dy == 0 and dx == 0):
                # want shifted[j] = x[j + dy*Wp + dx]  (jnp.roll semantics)
                shift = (-(dy * Wp + dx)) % Npad
                acc = acc + pltpu.roll(x, shift, axis=1) * wdw_ref[t]
            t += 1
    h = _leaky(acc + bdw_ref[...])              # bias + LeakyReLU in f32 (VPU)

    # ---- pointwise 1x1: single lane-dense MXU matmul (bf16 in, f32 acc) ----
    out = jnp.dot(wpw_ref[...], h.astype(jnp.bfloat16),
                  preferred_element_type=jnp.float32)        # (Cout, Npad)
    o_ref[...] = _leaky(out + bpw_ref[...]).astype(o_ref.dtype)


def dwconv(x_nchw, w_dw, b_dw, w_pw, b_pw):
    """DWConv forward.

    x_nchw: (N, Cin, H, W) f32
    w_dw  : (Cin, 3, 3)  folded depthwise RepConv weight (per-channel 3x3)
    b_dw  : (Cin,)
    w_pw  : (Cout, Cin)  folded pointwise RepConv weight
    b_pw  : (Cout,)
    returns (N, Cout, H, W)
    """
    N, Cin, H, W = x_nchw.shape
    Cout = w_pw.shape[0]
    Hp, Wp = H + 2, W + 2
    flat = Hp * Wp
    Npad = ((flat + 127) // 128) * 128          # lane-dense: multiple of 128

    # layout plumbing (wrapper / XLA side): NCHW -> zero-pad -> flatten -> lane-pad
    x_pad = jnp.pad(x_nchw, ((0, 0), (0, 0), (1, 1), (1, 1)))
    x_flat = jnp.pad(x_pad.reshape(N, Cin, flat),
                     ((0, 0), (0, 0), (0, Npad - flat)))

    wdw_k = w_dw.reshape(Cin, 9).T.reshape(9, Cin, 1).astype(jnp.float32)
    bdw_k = b_dw.reshape(Cin, 1).astype(jnp.float32)
    wpw_k = w_pw.astype(jnp.bfloat16)           # MXU operands in bf16
    bpw_k = b_pw.reshape(Cout, 1).astype(jnp.float32)

    kernel = functools.partial(_dwconv_kernel, Wp=Wp, Npad=Npad)

    out_flat = pl.pallas_call(
        kernel,
        out_shape=jax.ShapeDtypeStruct((N, Cout, Npad), x_nchw.dtype),
        grid_spec=pltpu.PrefetchScalarGridSpec(
            num_scalar_prefetch=0,
            grid=(N,),
            in_specs=[
                pl.BlockSpec((pl.Squeezed(), Cin, Npad), lambda n: (n, 0, 0)),
                pl.BlockSpec((9, Cin, 1), lambda n: (0, 0, 0)),
                pl.BlockSpec((Cin, 1), lambda n: (0, 0)),
                pl.BlockSpec((Cout, Cin), lambda n: (0, 0)),
                pl.BlockSpec((Cout, 1), lambda n: (0, 0)),
            ],
            out_specs=pl.BlockSpec((pl.Squeezed(), Cout, Npad),
                                   lambda n: (n, 0, 0)),
        ),
        compiler_params=pltpu.CompilerParams(
            # batch iterations are independent -> shard across TCs on v7x
            dimension_semantics=("parallel",)),
    )(x_flat, wdw_k, bdw_k, wpw_k, bpw_k)

    # crop padded grid back to (N, Cout, H, W)
    out = out_flat[:, :, :flat].reshape(N, Cout, Hp, Wp)[:, :, 1:1 + H, 1:1 + W]
    return out


def _reference(x_nchw, w_dw, b_dw, w_pw, b_pw):
    N, Cin, H, W = x_nchw.shape
    dn = ("NHWC", "HWIO", "NHWC")
    x = jnp.transpose(x_nchw, (0, 2, 3, 1))
    wdw_hwio = jnp.transpose(w_dw, (1, 2, 0))[:, :, None, :]     # (3,3,1,Cin)
    h = jax.lax.conv_general_dilated(x, wdw_hwio, (1, 1), "SAME",
                                     dimension_numbers=dn,
                                     feature_group_count=Cin) + b_dw
    h = _leaky(h)
    wpw_hwio = jnp.transpose(w_pw, (1, 0))[None, None, :, :]     # (1,1,Cin,Cout)
    y = jax.lax.conv_general_dilated(h, wpw_hwio, (1, 1), "VALID",
                                     dimension_numbers=dn) + b_pw
    y = _leaky(y)
    return jnp.transpose(y, (0, 3, 1, 2))


if __name__ == "__main__":
    N, Cin, Cout, H, W = 2, 4, 8, 16, 16
    key = jax.random.PRNGKey(0)
    kx, k1, k2, k3, k4 = jax.random.split(key, 5)

    x = jax.random.normal(kx, (N, Cin, H, W), jnp.float32)
    w_dw = jax.random.normal(k1, (Cin, 3, 3), jnp.float32) * 0.1
    b_dw = jax.random.normal(k2, (Cin,), jnp.float32) * 0.1
    w_pw = jax.random.normal(k3, (Cout, Cin), jnp.float32) * 0.1
    b_pw = jax.random.normal(k4, (Cout,), jnp.float32) * 0.1

    y = jax.block_until_ready(dwconv(x, w_dw, b_dw, w_pw, b_pw))
    y_ref = jax.block_until_ready(_reference(x, w_dw, b_dw, w_pw, b_pw))

    assert y.shape == (N, Cout, H, W)
    # pointwise matmul uses bf16 operands (f32 accumulate) -> loose tolerance
    assert jnp.allclose(y, y_ref, rtol=2e-2, atol=2e-2)
    print("KERNEL_OK")
</pallas_src>

<mosaic_0001>
module attributes {stable_mosaic.version = 11 : i64} {
  func.func @_dwconv_kernel(%arg0: i32, %arg1: memref<1x4x384xf32, #tpu.memory_space<vmem>>, %arg2: memref<9x4x1xf32, #tpu.memory_space<vmem>>, %arg3: memref<4x1xf32, #tpu.memory_space<vmem>>, %arg4: memref<8x4xbf16, #tpu.memory_space<vmem>>, %arg5: memref<8x1xf32, #tpu.memory_space<vmem>>, %arg6: memref<1x8x384xf32, #tpu.memory_space<vmem>>) attributes {dimension_semantics = [#tpu.dimension_semantics<parallel>], iteration_bounds = array<i64: 2>, scalar_prefetch = 0 : i64, scratch_operands = 0 : i64, tpu.core_type = #tpu.core_type<tc>, window_params = [{transform_indices = @transform_0, window_bounds = array<i64: 1, 4, 384>}, {pipeline_mode = #tpu.pipeline_mode<synchronous>, transform_indices = @transform_1, window_bounds = array<i64: 9, 4, 1>}, {pipeline_mode = #tpu.pipeline_mode<synchronous>, transform_indices = @transform_2, window_bounds = array<i64: 4, 1>}, {pipeline_mode = #tpu.pipeline_mode<synchronous>, transform_indices = @transform_3, window_bounds = array<i64: 8, 4>}, {pipeline_mode = #tpu.pipeline_mode<synchronous>, transform_indices = @transform_4, window_bounds = array<i64: 8, 1>}, {transform_indices = @transform_5, window_bounds = array<i64: 1, 8, 384>}]} {
    %c0 = arith.constant 0 : index
    %c0_0 = arith.constant 0 : index
    %c0_1 = arith.constant 0 : index
    %0 = vector.load %arg1[%c0, %c0_0, %c0_1] : memref<1x4x384xf32, #tpu.memory_space<vmem>>, vector<1x4x384xf32>
    %1 = vector.shape_cast %0 : vector<1x4x384xf32> to vector<4x384xf32>
    %c4 = arith.constant 4 : index
    %c0_2 = arith.constant 0 : index
    %c0_3 = arith.constant 0 : index
    %2 = vector.load %arg2[%c4, %c0_2, %c0_3] : memref<9x4x1xf32, #tpu.memory_space<vmem>>, vector<1x4x1xf32>
    %3 = vector.shape_cast %2 : vector<1x4x1xf32> to vector<4x1xf32>
    %4 = vector.broadcast %3 : vector<4x1xf32> to vector<4x384xf32>
    %5 = arith.mulf %1, %4 : vector<4x384xf32>
    %c19_i32 = arith.constant 19 : i32
    %6 = tpu.dynamic_rotate %1 by %c19_i32 dim 1 : vector<4x384xf32>, i32 -> vector<4x384xf32>
    %c0_4 = arith.constant 0 : index
    %c0_5 = arith.constant 0 : index
    %c0_6 = arith.constant 0 : index
    %7 = vector.load %arg2[%c0_4, %c0_5, %c0_6] : memref<9x4x1xf32, #tpu.memory_space<vmem>>, vector<1x4x1xf32>
    %8 = vector.shape_cast %7 : vector<1x4x1xf32> to vector<4x1xf32>
    %9 = vector.broadcast %8 : vector<4x1xf32> to vector<4x384xf32>
    %10 = arith.mulf %6, %9 : vector<4x384xf32>
    %11 = arith.addf %5, %10 : vector<4x384xf32>
    %c18_i32 = arith.constant 18 : i32
    %12 = tpu.dynamic_rotate %1 by %c18_i32 dim 1 : vector<4x384xf32>, i32 -> vector<4x384xf32>
    %c1 = arith.constant 1 : index
    %c0_7 = arith.constant 0 : index
    %c0_8 = arith.constant 0 : index
    %13 = vector.load %arg2[%c1, %c0_7, %c0_8] : memref<9x4x1xf32, #tpu.memory_space<vmem>>, vector<1x4x1xf32>
    %14 = vector.shape_cast %13 : vector<1x4x1xf32> to vector<4x1xf32>
    %15 = vector.broadcast %14 : vector<4x1xf32> to vector<4x384xf32>
    %16 = arith.mulf %12, %15 : vector<4x384xf32>
    %17 = arith.addf %11, %16 : vector<4x384xf32>
    %c17_i32 = arith.constant 17 : i32
    %18 = tpu.dynamic_rotate %1 by %c17_i32 dim 1 : vector<4x384xf32>, i32 -> vector<4x384xf32>
    %c2 = arith.constant 2 : index
    %c0_9 = arith.constant 0 : index
    %c0_10 = arith.constant 0 : index
    %19 = vector.load %arg2[%c2, %c0_9, %c0_10] : memref<9x4x1xf32, #tpu.memory_space<vmem>>, vector<1x4x1xf32>
    %20 = vector.shape_cast %19 : vector<1x4x1xf32> to vector<4x1xf32>
    %21 = vector.broadcast %20 : vector<4x1xf32> to vector<4x384xf32>
    %22 = arith.mulf %18, %21 : vector<4x384xf32>
    %23 = arith.addf %17, %22 : vector<4x384xf32>
    %c1_i32 = arith.constant 1 : i32
    %24 = tpu.dynamic_rotate %1 by %c1_i32 dim 1 : vector<4x384xf32>, i32 -> vector<4x384xf32>
    %c3 = arith.constant 3 : index
    %c0_11 = arith.constant 0 : index
    %c0_12 = arith.constant 0 : index
    %25 = vector.load %arg2[%c3, %c0_11, %c0_12] : memref<9x4x1xf32, #tpu.memory_space<vmem>>, vector<1x4x1xf32>
    %26 = vector.shape_cast %25 : vector<1x4x1xf32> to vector<4x1xf32>
    %27 = vector.broadcast %26 : vector<4x1xf32> to vector<4x384xf32>
    %28 = arith.mulf %24, %27 : vector<4x384xf32>
    %29 = arith.addf %23, %28 : vector<4x384xf32>
    %c383_i32 = arith.constant 383 : i32
    %30 = tpu.dynamic_rotate %1 by %c383_i32 dim 1 : vector<4x384xf32>, i32 -> vector<4x384xf32>
    %c5 = arith.constant 5 : index
    %c0_13 = arith.constant 0 : index
    %c0_14 = arith.constant 0 : index
    %31 = vector.load %arg2[%c5, %c0_13, %c0_14] : memref<9x4x1xf32, #tpu.memory_space<vmem>>, vector<1x4x1xf32>
    %32 = vector.shape_cast %31 : vector<1x4x1xf32> to vector<4x1xf32>
    %33 = vector.broadcast %32 : vector<4x1xf32> to vector<4x384xf32>
    %34 = arith.mulf %30, %33 : vector<4x384xf32>
    %35 = arith.addf %29, %34 : vector<4x384xf32>
    %c367_i32 = arith.constant 367 : i32
    %36 = tpu.dynamic_rotate %1 by %c367_i32 dim 1 : vector<4x384xf32>, i32 -> vector<4x384xf32>
    %c6 = arith.constant 6 : index
    %c0_15 = arith.constant 0 : index
    %c0_16 = arith.constant 0 : index
    %37 = vector.load %arg2[%c6, %c0_15, %c0_16] : memref<9x4x1xf32, #tpu.memory_space<vmem>>, vector<1x4x1xf32>
    %38 = vector.shape_cast %37 : vector<1x4x1xf32> to vector<4x1xf32>
    %39 = vector.broadcast %38 : vector<4x1xf32> to vector<4x384xf32>
    %40 = arith.mulf %36, %39 : vector<4x384xf32>
    %41 = arith.addf %35, %40 : vector<4x384xf32>
    %c366_i32 = arith.constant 366 : i32
    %42 = tpu.dynamic_rotate %1 by %c366_i32 dim 1 : vector<4x384xf32>, i32 -> vector<4x384xf32>
    %c7 = arith.constant 7 : index
    %c0_17 = arith.constant 0 : index
    %c0_18 = arith.constant 0 : index
    %43 = vector.load %arg2[%c7, %c0_17, %c0_18] : memref<9x4x1xf32, #tpu.memory_space<vmem>>, vector<1x4x1xf32>
    %44 = vector.shape_cast %43 : vector<1x4x1xf32> to vector<4x1xf32>
    %45 = vector.broadcast %44 : vector<4x1xf32> to vector<4x384xf32>
    %46 = arith.mulf %42, %45 : vector<4x384xf32>
    %47 = arith.addf %41, %46 : vector<4x384xf32>
    %c365_i32 = arith.constant 365 : i32
    %48 = tpu.dynamic_rotate %1 by %c365_i32 dim 1 : vector<4x384xf32>, i32 -> vector<4x384xf32>
    %c8 = arith.constant 8 : index
    %c0_19 = arith.constant 0 : index
    %c0_20 = arith.constant 0 : index
    %49 = vector.load %arg2[%c8, %c0_19, %c0_20] : memref<9x4x1xf32, #tpu.memory_space<vmem>>, vector<1x4x1xf32>
    %50 = vector.shape_cast %49 : vector<1x4x1xf32> to vector<4x1xf32>
    %51 = vector.broadcast %50 : vector<4x1xf32> to vector<4x384xf32>
    %52 = arith.mulf %48, %51 : vector<4x384xf32>
    %53 = arith.addf %47, %52 : vector<4x384xf32>
    %c0_21 = arith.constant 0 : index
    %c0_22 = arith.constant 0 : index
    %54 = vector.load %arg3[%c0_21, %c0_22] : memref<4x1xf32, #tpu.memory_space<vmem>>, vector<4x1xf32>
    %55 = vector.broadcast %54 : vector<4x1xf32> to vector<4x384xf32>
    %56 = arith.addf %53, %55 : vector<4x384xf32>
    %cst = arith.constant 0.000000e+00 : f32
    %57 = vector.broadcast %cst : f32 to vector<4x384xf32>
    %58 = arith.cmpf ogt, %56, %57 : vector<4x384xf32>
    %cst_23 = arith.constant 0.00999999977 : f32
    %59 = vector.broadcast %cst_23 : f32 to vector<4x384xf32>
    %60 = arith.mulf %59, %56 : vector<4x384xf32>
    %61 = arith.select %58, %56, %60 : vector<4x384xi1>, vector<4x384xf32>
    %c0_24 = arith.constant 0 : index
    %c0_25 = arith.constant 0 : index
    %62 = vector.load %arg4[%c0_24, %c0_25] : memref<8x4xbf16, #tpu.memory_space<vmem>>, vector<8x4xbf16>
    %63 = arith.truncf %61 : vector<4x384xf32> to vector<4x384xbf16>
    %cst_26 = arith.constant dense<0.000000e+00> : vector<8x384xf32>
    %64 = tpu.matmul %62, %63, %cst_26 {dimension_numbers = #tpu.dot_dimension_numbers<[1], [0], [0], [1], [0, 0, 1, 1], [], []>} : vector<8x4xbf16>, vector<4x384xbf16>, vector<8x384xf32> -> vector<8x384xf32>
    %c0_27 = arith.constant 0 : index
    %c0_28 = arith.constant 0 : index
    %65 = vector.load %arg5[%c0_27, %c0_28] : memref<8x1xf32, #tpu.memory_space<vmem>>, vector<8x1xf32>
    %66 = vector.broadcast %65 : vector<8x1xf32> to vector<8x384xf32>
    %67 = arith.addf %64, %66 : vector<8x384xf32>
    %cst_29 = arith.constant 0.000000e+00 : f32
    %68 = vector.broadcast %cst_29 : f32 to vector<8x384xf32>
    %69 = arith.cmpf ogt, %67, %68 : vector<8x384xf32>
    %cst_30 = arith.constant 0.00999999977 : f32
    %70 = vector.broadcast %cst_30 : f32 to vector<8x384xf32>
    %71 = arith.mulf %70, %67 : vector<8x384xf32>
    %72 = arith.select %69, %67, %71 : vector<8x384xi1>, vector<8x384xf32>
    %c0_31 = arith.constant 0 : index
    %c0_32 = arith.constant 0 : index
    %c0_33 = arith.constant 0 : index
    %73 = vector.load %arg6[%c0_31, %c0_32, %c0_33] : memref<1x8x384xf32, #tpu.memory_space<vmem>>, vector<1x8x384xf32>
    %74 = vector.shape_cast %73 : vector<1x8x384xf32> to vector<8x384xf32>
    %75 = vector.shape_cast %72 : vector<8x384xf32> to vector<1x8x384xf32>
    tpu.vector_store %arg6[%c0_31, %c0_32, %c0_33], %75 {strides = array<i32>} : memref<1x8x384xf32, #tpu.memory_space<vmem>>, vector<1x8x384xf32>,
    return
  }
  func.func @transform_0(%arg0: i32) -> (i32, i32, i32) {
    %c0_i32 = arith.constant 0 : i32
    %c0_i32_0 = arith.constant 0 : i32
    %c0_i32_1 = arith.constant 0 : i32
    return %arg0, %c0_i32, %c0_i32_0 : i32, i32, i32
  }
  func.func @transform_1(%arg0: i32) -> (i32, i32, i32) {
    %c0_i32 = arith.constant 0 : i32
    %c0_i32_0 = arith.constant 0 : i32
    %c0_i32_1 = arith.constant 0 : i32
    %c0_i32_2 = arith.constant 0 : i32
    return %c0_i32, %c0_i32_0, %c0_i32_1 : i32, i32, i32
  }
  func.func @transform_2(%arg0: i32) -> (i32, i32) {
    %c0_i32 = arith.constant 0 : i32
    %c0_i32_0 = arith.constant 0 : i32
    %c0_i32_1 = arith.constant 0 : i32
    return %c0_i32, %c0_i32_0 : i32, i32
  }
  func.func @transform_3(%arg0: i32) -> (i32, i32) {
    %c0_i32 = arith.constant 0 : i32
    %c0_i32_0 = arith.constant 0 : i32
    %c0_i32_1 = arith.constant 0 : i32
    return %c0_i32, %c0_i32_0 : i32, i32
  }
  func.func @transform_4(%arg0: i32) -> (i32, i32) {
    %c0_i32 = arith.constant 0 : i32
    %c0_i32_0 = arith.constant 0 : i32
    %c0_i32_1 = arith.constant 0 : i32
    return %c0_i32, %c0_i32_0 : i32, i32
  }
  func.func @transform_5(%arg0: i32) -> (i32, i32, i32) {
    %c0_i32 = arith.constant 0 : i32
    %c0_i32_0 = arith.constant 0 : i32
    %c0_i32_1 = arith.constant 0 : i32
    return %arg0, %c0_i32, %c0_i32_0 : i32, i32, i32
  }
}

</mosaic_0001>

<llo_original>
// kernel: tpu_custom_call.1
$region0: #{tpu_custom_call.1}
  #allocation0 [shape = 'u32[]', space=smem, size = 0x4, offset = 0x4, fixed_abs, tag = 'smem constant byte address 0x4 - core index']
  #allocation1 [shape = 'u32[144,128]{1,0:T(1,128)}', space=vmem, size = 0x12000, scoped, tag = 'internal scratch']
  %s0 = inlined_call_operand.vmem [shape: f32[2,4,384], index: 0, kind: input, shape index: {}]
  %s1 = inlined_call_operand.vmem [shape: f32[9,4,1], index: 1, kind: input, shape index: {}]
  %s2 = inlined_call_operand.vmem [shape: f32[4,1], index: 2, kind: input, shape index: {}]
  %s3 = inlined_call_operand.vmem [shape: bf16[8,4], index: 3, kind: input, shape index: {}]
  %s4 = inlined_call_operand.vmem [shape: f32[8,1], index: 4, kind: input, shape index: {}]
  %s5 = inlined_call_operand.hbm [shape: f32[2,8,384], index: 5, kind: output, shape index: {}]
  %s6 = sld [smem:[#allocation0]]
  $region53: #{tpu_custom_call.1} parent=0
    _
  %s8 = ssub.s32 1, %s6
  %s9 = scalar_select 0, %s8, %s6
  $region1: #{tpu_custom_call.1} parent=0
    #allocation2 [shape = 'u8[24576]{0}', space=vmem, size = 0x6000, scoped, tag = 'output window, operand 0']
    #allocation3 [shape = 's32[2]{0}', space=sflag, size = 0x8, scoped, tag = 'scoped memory for tpu_custom_call.1']
    %10 = vsyncpa [#allocation3], 0
    %s11 = scalar_lea.sflag [#allocation3], 1
    %12 = vsyncpa %s11, 0
    loop: start=0, step=1, limit=4
    $region2: #{tpu_custom_call.1} parent=1 // loop_pre_header
      _
    $region3: #{tpu_custom_call.1} parent=1 // loop_header
      %s14 = sphi 0, %s18
      %p15 = scmp.ge.s32.totalorder %s14, 4
      %s24 = sphi 0, %s26
      %s27 = sphi 0, %s24
      %s28 = sphi 0, %s27
      %s44 = sphi 0, %s28
      %s48 = sphi 0, %s48
      %s50 = sphi 0, %s48
      %s51 = sphi 0, %s50
      %s65 = sphi 0, %s51
      %s69 = sphi 0, %s69
      %s71 = sphi 0, %s69
      %s72 = sphi 0, %s71
      %s86 = sphi 0, %s72
      %s90 = sphi 0, %s90
      %s92 = sphi 0, %s90
      %s93 = sphi 0, %s92
      %s107 = sphi 0, %s93
      %s111 = sphi 0, %s111
      %s113 = sphi 0, %s111
      %s114 = sphi 0, %s113
      %s128 = sphi 0, %s114
      %s134 = sphi 0, %s136
      %s137 = sphi 0, %s134
      %s138 = sphi 0, %s137
      %s154 = sphi 0, %s138
    $region4: #{tpu_custom_call.1} parent=1 // loop_header_branch
      %17 = sbr.rel (%p15) target = $region8
    $region5: #{tpu_custom_call.1} parent=1 // loop_body
      %s19 = ssub.s32 %s14, 1
      %s20 = ssub.s32 %s14, 2
      %s21 = sadd.s32 %s14, 1
      %s22 = ssub.s32 %s14, %s21
      %p23 = scmp.eq.s32.totalorder %s22, 0
      %s25 = sadd.s32 %s24, 1
      %s26 = scalar_select %p23, %s24, %s25
      %p29 = pneg %p23
      %p30 = scmp.eq.s32.totalorder %s14, 1
      %p31 = por %p29, %p30
      %p32 = scmp.ne.s32.totalorder %s24, %s27
      %p33 = scmp.eq.s32.totalorder %s14, 0
      %p34 = por %p32, %p33
      %p35 = scmp.ne.s32.totalorder %s24, %s27
      %p36 = scmp.eq.s32.totalorder %s19, 1
      %p37 = por %p35, %p36
      %p38 = scmp.ne.s32.totalorder %s27, %s28
      %p39 = scmp.eq.s32.totalorder %s19, 0
      %p40 = por %p38, %p39
      %p41 = scmp.ne.s32.totalorder %s27, %s28
      %p42 = scmp.eq.s32.totalorder %s20, 1
      %p43 = por %p41, %p42
      %p45 = scmp.ne.s32.totalorder %s28, %s44
      %p46 = scmp.eq.s32.totalorder %s20, 0
      %p47 = por %p45, %p46
      %s49 = sadd.s32 %s48, 1
      %p52 = scmp.eq.s32.totalorder %s14, 1
      %p53 = scmp.ne.s32.totalorder %s48, %s50
      %p54 = scmp.eq.s32.totalorder %s14, 0
      %p55 = por %p53, %p54
      %p56 = scmp.ne.s32.totalorder %s48, %s50
      %p57 = scmp.eq.s32.totalorder %s19, 1
      %p58 = por %p56, %p57
      %p59 = scmp.ne.s32.totalorder %s50, %s51
      %p60 = scmp.eq.s32.totalorder %s19, 0
      %p61 = por %p59, %p60
      %p62 = scmp.ne.s32.totalorder %s50, %s51
      %p63 = scmp.eq.s32.totalorder %s20, 1
      %p64 = por %p62, %p63
      %p66 = scmp.ne.s32.totalorder %s51, %s65
      %p67 = scmp.eq.s32.totalorder %s20, 0
      %p68 = por %p66, %p67
      %s70 = sadd.s32 %s69, 1
      %p73 = scmp.eq.s32.totalorder %s14, 1
      %p74 = scmp.ne.s32.totalorder %s69, %s71
      %p75 = scmp.eq.s32.totalorder %s14, 0
      %p76 = por %p74, %p75
      %p77 = scmp.ne.s32.totalorder %s69, %s71
      %p78 = scmp.eq.s32.totalorder %s19, 1
      %p79 = por %p77, %p78
      %p80 = scmp.ne.s32.totalorder %s71, %s72
      %p81 = scmp.eq.s32.totalorder %s19, 0
      %p82 = por %p80, %p81
      %p83 = scmp.ne.s32.totalorder %s71, %s72
      %p84 = scmp.eq.s32.totalorder %s20, 1
      %p85 = por %p83, %p84
      %p87 = scmp.ne.s32.totalorder %s72, %s86
      %p88 = scmp.eq.s32.totalorder %s20, 0
      %p89 = por %p87, %p88
      %s91 = sadd.s32 %s90, 1
      %p94 = scmp.eq.s32.totalorder %s14, 1
      %p95 = scmp.ne.s32.totalorder %s90, %s92
      %p96 = scmp.eq.s32.totalorder %s14, 0
      %p97 = por %p95, %p96
      %p98 = scmp.ne.s32.totalorder %s90, %s92
      %p99 = scmp.eq.s32.totalorder %s19, 1
      %p100 = por %p98, %p99
      %p101 = scmp.ne.s32.totalorder %s92, %s93
      %p102 = scmp.eq.s32.totalorder %s19, 0
      %p103 = por %p101, %p102
      %p104 = scmp.ne.s32.totalorder %s92, %s93
      %p105 = scmp.eq.s32.totalorder %s20, 1
      %p106 = por %p104, %p105
      %p108 = scmp.ne.s32.totalorder %s93, %s107
      %p109 = scmp.eq.s32.totalorder %s20, 0
      %p110 = por %p108, %p109
      %s112 = sadd.s32 %s111, 1
      %p115 = scmp.eq.s32.totalorder %s14, 1
      %p116 = scmp.ne.s32.totalorder %s111, %s113
      %p117 = scmp.eq.s32.totalorder %s14, 0
      %p118 = por %p116, %p117
      %p119 = scmp.ne.s32.totalorder %s111, %s113
      %p120 = scmp.eq.s32.totalorder %s19, 1
      %p121 = por %p119, %p120
      %p122 = scmp.ne.s32.totalorder %s113, %s114
      %p123 = scmp.eq.s32.totalorder %s19, 0
      %p124 = por %p122, %p123
      %p125 = scmp.ne.s32.totalorder %s113, %s114
      %p126 = scmp.eq.s32.totalorder %s20, 1
      %p127 = por %p125, %p126
      %p129 = scmp.ne.s32.totalorder %s114, %s128
      %p130 = scmp.eq.s32.totalorder %s20, 0
      %p131 = por %p129, %p130
      %s132 = ssub.s32 %s14, %s21
      %p133 = scmp.eq.s32.totalorder %s132, 0
      %s135 = sadd.s32 %s134, 1
      %s136 = scalar_select %p133, %s134, %s135
      %p139 = pneg %p133
      %p140 = scmp.eq.s32.totalorder %s14, 1
      %p141 = por %p139, %p140
      %p142 = scmp.ne.s32.totalorder %s134, %s137
      %p143 = scmp.eq.s32.totalorder %s14, 0
      %p144 = por %p142, %p143
      %p145 = scmp.ne.s32.totalorder %s134, %s137
      %p146 = scmp.eq.s32.totalorder %s19, 1
      %p147 = por %p145, %p146
      %p148 = scmp.ne.s32.totalorder %s137, %s138
      %p149 = scmp.eq.s32.totalorder %s19, 0
      %p150 = por %p148, %p149
      %p151 = scmp.ne.s32.totalorder %s137, %s138
      %p152 = scmp.eq.s32.totalorder %s20, 1
      %p153 = por %p151, %p152
      %p155 = scmp.ne.s32.totalorder %s138, %s154
      %p156 = scmp.eq.s32.totalorder %s20, 0
      %p157 = por %p155, %p156
      %p158 = scmp.le.s32.totalorder 1, %s14
      %p159 = scmp.lt.s32.totalorder %s14, 3
      %p160 = pnand %p158, %p159
      %p161 = pneg %p160
      // Predicated region
      $region9: #{tpu_custom_call.1} parent=5 // pred_check
        _
      $region10: #{tpu_custom_call.1} parent=5 // pred_check_branch
        %163 = sbr.rel (%p160) target = $region12
      $region11: #{tpu_custom_call.1} parent=5 // pred_region
        %s164 = ssub.s32 %s14, 1
        // Predicated region
        $region13: #{tpu_custom_call.1} parent=11 // pred_check
          %p165 = pneg %p61
        $region14: #{tpu_custom_call.1} parent=11 // pred_check_branch
          %167 = sbr.rel (%p165) target = $region16
        $region15: #{tpu_custom_call.1} parent=11 // pred_region
          _
        $region16: #{tpu_custom_call.1} parent=11 // pred_fallthru
          _
        // Predicated region
        $region17: #{tpu_custom_call.1} parent=11 // pred_check
          %p168 = pneg %p82
        $region18: #{tpu_custom_call.1} parent=11 // pred_check_branch
          %170 = sbr.rel (%p168) target = $region20
        $region19: #{tpu_custom_call.1} parent=11 // pred_region
          _
        $region20: #{tpu_custom_call.1} parent=11 // pred_fallthru
          _
        // Predicated region
        $region21: #{tpu_custom_call.1} parent=11 // pred_check
          %p171 = pneg %p103
        $region22: #{tpu_custom_call.1} parent=11 // pred_check_branch
          %173 = sbr.rel (%p171) target = $region24
        $region23: #{tpu_custom_call.1} parent=11 // pred_region
          _
        $region24: #{tpu_custom_call.1} parent=11 // pred_fallthru
          _
        // Predicated region
        $region25: #{tpu_custom_call.1} parent=11 // pred_check
          %p174 = pneg %p124
        $region26: #{tpu_custom_call.1} parent=11 // pred_check_branch
          %176 = sbr.rel (%p174) target = $region28
        $region27: #{tpu_custom_call.1} parent=11 // pred_region
          _
        $region28: #{tpu_custom_call.1} parent=11 // pred_fallthru
          _
      $region12: #{tpu_custom_call.1} parent=5 // pred_fallthru
        _
      %p177 = scmp.lt.s32.totalorder %s14, 2
      // Predicated region
      $region29: #{tpu_custom_call.1} parent=5 // pred_check
        %p178 = pneg %p177
      $region30: #{tpu_custom_call.1} parent=5 // pred_check_branch
        %180 = sbr.rel (%p178) target = $region32
      $region31: #{tpu_custom_call.1} parent=5 // pred_region
        // Predicated region
        $region33: #{tpu_custom_call.1} parent=31 // pred_check
          %p181 = pneg %p34
        $region34: #{tpu_custom_call.1} parent=31 // pred_check_branch
          %183 = sbr.rel (%p181) target = $region36
        $region35: #{tpu_custom_call.1} parent=31 // pred_region
          %p184 = scmp.lt.s32.totalorder %s14, 1
          %s185 = scalar_select %p184, %s14, 1
          %s186 = smul.addr %s185, 3
          %s187 = smul.addr %s186, 4
          %s188 = scalar_lea.vmem %s0, %s187
        $region36: #{tpu_custom_call.1} parent=31 // pred_fallthru
          _
      $region32: #{tpu_custom_call.1} parent=5 // pred_fallthru
        _
      %p189 = scmp.le.s32.totalorder 1, %s14
      %p190 = scmp.lt.s32.totalorder %s14, 3
      %p191 = pnand %p189, %p190
      %p192 = pneg %p191
      // Predicated region
      $region37: #{tpu_custom_call.1} parent=5 // pred_check
        _
      $region38: #{tpu_custom_call.1} parent=5 // pred_check_branch
        %194 = sbr.rel (%p191) target = $region40
      $region39: #{tpu_custom_call.1} parent=5 // pred_region
        %s195 = ssub.s32 %s14, 1
        %p196 = scmp.lt.s32.totalorder %s19, 1
        %s197 = scalar_select %p196, %s19, 1
        %s198 = smul.addr %s197, 3
        %s199 = smul.addr %s198, 4
        %s200 = scalar_lea.vmem %s0, %s199
        %p201 = pneg %p40
        %p202 = pneg %p37
        %p203 = pneg %p61
        %p204 = pneg %p58
        %p205 = pneg %p82
        %p206 = pneg %p79
        %p207 = pneg %p103
        %p208 = pneg %p100
        %p209 = pneg %p124
        %p210 = pneg %p121
        %p211 = pneg %p150
        %p212 = pneg %p147
        %s213 = sand.u32 %s137, 1
        %s214 = scalar_lea.sflag [#allocation3], %s213
        %s215 = sand.u32 %s137, 1
        %s216 = smul.addr %s215, 24
        %s217 = scalar_lea.vmem [#allocation2], %s216
        %p218 = scmp.lt.s32.totalorder %s19, 1
        %s219 = scalar_select %p218, %s19, 1
        %s220 = smul.addr %s219, 3
        %s221 = smul.addr %s220, 4
        %s222 = scalar_lea.vmem %s0, %s221
        %v224 = vld [vmem:[%s222] sm:$0xff]
        %v225 = vld [vmem:[%s222 + $0x8] sm:$0xf]
        %s226 = scalar_lea.vmem %s1, 16
        %v227 = vld [vmem:[%s226] sm:$0xf]
        %229 = vset.pattern.permute.xlu0 0
        %230 = vperm.xlu0 %229, %v227
        %v231 = vpop.permute.xlu0 %230
        %v233 = vunpack.c.l.s4 839922192
        %v234 = vunpack.c.0.s8 %v233
        %v235 = vlaneseq
        %v236 = vshrl.u32 %v235, 7
        %v237 = vsub.s32 %v234, %v236
        %v238 = vrot.slane %v231, %v237
        %v240 = vmul.f32 %v224, %v238
        %v241 = vmul.f32 %v225, %v238
        %v243 = vcombine.high %v224, %v224
        %245 = vrot.lane.b32.xlu0 %v224, 19
        %v246 = vpop.permute.xlu0 %245
        %247 = vrot.lane.b32.xlu0 %v243, 19
        %v248 = vpop.permute.xlu0 %247
        %249 = vrot.lane.b32.xlu0 %v225, 19
        %v250 = vpop.permute.xlu0 %249
        %v251 = vlaneseq
        %v252 = vand.u32 %v251, 127
        %vm253 = vcmp.lt.s32.totalorder %v252, 19
        %v254 = vsel %vm253, %v248, %v250
        %v255 = vsel %vm253, %v246, %v248
        %v256 = vsel %vm253, %v250, %v246
        %v257 = vld [vmem:[%s1] sm:$0xf]
        %259 = vset.pattern.permute.xlu0 0
        %260 = vperm.xlu0 %259, %v257
        %v261 = vpop.permute.xlu0 %260
        %v263 = vmul.f32 %v256, %v261
        %v264 = vmul.f32 %v255, %v261
        %v265 = vmul.f32 %v254, %v261
        %v268 = vcombine.low %v263, %v264
        %v270 = vadd.f32 %v240, %v268
        %v271 = vadd.f32 %v241, %v265
        %272 = vrot.lane.b32.xlu0 %v224, 18
        %v273 = vpop.permute.xlu0 %272
        %274 = vrot.lane.b32.xlu0 %v243, 18
        %v275 = vpop.permute.xlu0 %274
        %276 = vrot.lane.b32.xlu0 %v225, 18
        %v277 = vpop.permute.xlu0 %276
        %vm278 = vcmp.lt.s32.totalorder %v252, 18
        %v279 = vsel %vm278, %v275, %v277
        %v280 = vsel %vm278, %v273, %v275
        %v281 = vsel %vm278, %v277, %v273
        %s282 = scalar_lea.vmem %s1, 4
        %v283 = vld [vmem:[%s282] sm:$0xf]
        %285 = vset.pattern.permute.xlu0 0
        %286 = vperm.xlu0 %285, %v283
        %v287 = vpop.permute.xlu0 %286
        %v289 = vmul.f32 %v281, %v287
        %v290 = vmul.f32 %v280, %v287
        %v291 = vmul.f32 %v279, %v287
        %v294 = vcombine.low %v289, %v290
        %v296 = vadd.f32 %v270, %v294
        %v297 = vadd.f32 %v271, %v291
        %298 = vrot.lane.b32.xlu0 %v224, 17
        %v299 = vpop.permute.xlu0 %298
        %300 = vrot.lane.b32.xlu0 %v243, 17
        %v301 = vpop.permute.xlu0 %300
        %302 = vrot.lane.b32.xlu0 %v225, 17
        %v303 = vpop.permute.xlu0 %302
        %vm304 = vcmp.lt.s32.totalorder %v252, 17
        %v305 = vsel %vm304, %v301, %v303
        %v306 = vsel %vm304, %v299, %v301
        %v307 = vsel %vm304, %v303, %v299
        %s308 = scalar_lea.vmem %s1, 8
        %v309 = vld [vmem:[%s308] sm:$0xf]
        %311 = vset.pattern.permute.xlu0 0
        %312 = vperm.xlu0 %311, %v309
        %v313 = vpop.permute.xlu0 %312
        %v315 = vmul.f32 %v307, %v313
        %v316 = vmul.f32 %v306, %v313
        %v317 = vmul.f32 %v305, %v313
        %v320 = vcombine.low %v315, %v316
        %v322 = vadd.f32 %v296, %v320
        %v323 = vadd.f32 %v297, %v317
        %324 = vrot.lane.b32.xlu0 %v224, 1
        %v325 = vpop.permute.xlu0 %324
        %326 = vrot.lane.b32.xlu0 %v243, 1
        %v327 = vpop.permute.xlu0 %326
        %328 = vrot.lane.b32.xlu0 %v225, 1
        %v329 = vpop.permute.xlu0 %328
        %vm330 = vcmp.lt.s32.totalorder %v252, 1
        %v331 = vsel %vm330, %v327, %v329
        %v332 = vsel %vm330, %v325, %v327
        %v333 = vsel %vm330, %v329, %v325
        %s334 = scalar_lea.vmem %s1, 12
        %v335 = vld [vmem:[%s334] sm:$0xf]
        %337 = vset.pattern.permute.xlu0 0
        %338 = vperm.xlu0 %337, %v335
        %v339 = vpop.permute.xlu0 %338
        %v341 = vmul.f32 %v333, %v339
        %v342 = vmul.f32 %v332, %v339
        %v343 = vmul.f32 %v331, %v339
        %v346 = vcombine.low %v341, %v342
        %v348 = vadd.f32 %v322, %v346
        %v349 = vadd.f32 %v323, %v343
        %350 = vrot.lane.b32.xlu0 %v224, 127
        %v351 = vpop.permute.xlu0 %350
        %352 = vrot.lane.b32.xlu0 %v243, 127
        %v353 = vpop.permute.xlu0 %352
        %354 = vrot.lane.b32.xlu0 %v225, 127
        %v355 = vpop.permute.xlu0 %354
        %vm356 = vcmp.lt.s32.totalorder %v252, 127
        %v357 = vsel %vm356, %v353, %v355
        %v358 = vsel %vm356, %v351, %v353
        %v359 = vsel %vm356, %v355, %v351
        %s360 = scalar_lea.vmem %s1, 20
        %v361 = vld [vmem:[%s360] sm:$0xf]
        %363 = vset.pattern.permute.xlu0 0
        %364 = vperm.xlu0 %363, %v361
        %v365 = vpop.permute.xlu0 %364
        %v367 = vmul.f32 %v358, %v365
        %v368 = vmul.f32 %v357, %v365
        %v369 = vmul.f32 %v359, %v365
        %v372 = vcombine.low %v367, %v368
        %v374 = vadd.f32 %v348, %v372
        %v375 = vadd.f32 %v349, %v369
        %376 = vrot.lane.b32.xlu0 %v224, 111
        %v377 = vpop.permute.xlu0 %376
        %378 = vrot.lane.b32.xlu0 %v243, 111
        %v379 = vpop.permute.xlu0 %378
        %380 = vrot.lane.b32.xlu0 %v225, 111
        %v381 = vpop.permute.xlu0 %380
        %vm382 = vcmp.lt.s32.totalorder %v252, 111
        %v383 = vsel %vm382, %v379, %v381
        %v384 = vsel %vm382, %v377, %v379
        %v385 = vsel %vm382, %v381, %v377
        %s386 = scalar_lea.vmem %s1, 24
        %v387 = vld [vmem:[%s386] sm:$0xf]
        %389 = vset.pattern.permute.xlu0 0
        %390 = vperm.xlu0 %389, %v387
        %v391 = vpop.permute.xlu0 %390
        %v393 = vmul.f32 %v384, %v391
        %v394 = vmul.f32 %v383, %v391
        %v395 = vmul.f32 %v385, %v391
        %v398 = vcombine.low %v393, %v394
        %v400 = vadd.f32 %v374, %v398
        %v401 = vadd.f32 %v375, %v395
        %402 = vrot.lane.b32.xlu0 %v224, 110
        %v403 = vpop.permute.xlu0 %402
        %404 = vrot.lane.b32.xlu0 %v243, 110
        %v405 = vpop.permute.xlu0 %404
        %406 = vrot.lane.b32.xlu0 %v225, 110
        %v407 = vpop.permute.xlu0 %406
        %vm408 = vcmp.lt.s32.totalorder %v252, 110
        %v409 = vsel %vm408, %v405, %v407
        %v410 = vsel %vm408, %v403, %v405
        %v411 = vsel %vm408, %v407, %v403
        %s412 = scalar_lea.vmem %s1, 28
        %v413 = vld [vmem:[%s412] sm:$0xf]
        %415 = vset.pattern.permute.xlu0 0
        %416 = vperm.xlu0 %415, %v413
        %v417 = vpop.permute.xlu0 %416
        %v419 = vmul.f32 %v410, %v417
        %v420 = vmul.f32 %v409, %v417
        %v421 = vmul.f32 %v411, %v417
        %v424 = vcombine.low %v419, %v420
        %v426 = vadd.f32 %v400, %v424
        %v427 = vadd.f32 %v401, %v421
        %428 = vrot.lane.b32.xlu0 %v224, 109
        %v429 = vpop.permute.xlu0 %428
        %430 = vrot.lane.b32.xlu0 %v243, 109
        %v431 = vpop.permute.xlu0 %430
        %432 = vrot.lane.b32.xlu0 %v225, 109
        %v433 = vpop.permute.xlu0 %432
        %vm434 = vcmp.lt.s32.totalorder %v252, 109
        %v435 = vsel %vm434, %v431, %v433
        %v436 = vsel %vm434, %v429, %v431
        %v437 = vsel %vm434, %v433, %v429
        %s438 = scalar_lea.vmem %s1, 32
        %v439 = vld [vmem:[%s438] sm:$0xf]
        %441 = vset.pattern.permute.xlu0 0
        %442 = vperm.xlu0 %441, %v439
        %v443 = vpop.permute.xlu0 %442
        %v445 = vmul.f32 %v436, %v443
        %v446 = vmul.f32 %v435, %v443
        %v447 = vmul.f32 %v437, %v443
        %v450 = vcombine.low %v445, %v446
        %v452 = vadd.f32 %v426, %v450
        %v453 = vadd.f32 %v427, %v447
        %v454 = vld [vmem:[%s2] sm:$0xf]
        %456 = vset.pattern.permute.xlu0 0
        %457 = vperm.xlu0 %456, %v454
        %v458 = vpop.permute.xlu0 %457
        %v460 = vunpack.c.l.s4 839922192
        %v461 = vunpack.c.0.s8 %v460
        %v462 = vlaneseq
        %v463 = vshrl.u32 %v462, 7
        %v464 = vsub.s32 %v461, %v463
        %v465 = vrot.slane %v458, %v464
        %v467 = vadd.f32 %v452, %v465
        %v468 = vadd.f32 %v453, %v465
        %vm469 = vcmp.gt.f32.partialorder %v467, 0.0
        %vm470 = vcmp.gt.f32.partialorder %v468, 0.0
        %v471 = vmul.f32 %v467, 0.01
        %v472 = vmul.f32 %v468, 0.01
        %v473 = vsel %vm469, %v467, %v471
        %v474 = vsel %vm470, %v468, %v472
        %v475 = vld [vmem:[%s3] sm:$0xf]
        %v477 = vcombine.high %v473, %v473
        %v479 = vpack.c.bf16 %v473, %v473
        %v480 = vpack.c.bf16 %v477, %v477
        %v481 = vpack.c.bf16 %v474, %v474
        %v482 = vld [vmem:[%s4] sm:$0xff]
        %484 = vset.pattern.permute.xlu0 0
        %485 = vperm.xlu0 %484, %v482
        %v486 = vpop.permute.xlu0 %485
        %vm488 = vcmask 31744
        %v490 = vsel %vm488, %v475, 0
        %vm492 = vcmask 1041408
        %v494 = vsel %vm492, %v479, 0
        %v497 = vsel %vm492, %v480, 0
        %v500 = vsel %vm492, %v481, 0
        %502 = vmatprep.subr.bf16.mxu0 0
        %503 = vmatpush1.bf16.msra.mxu0 0
        %504 = vmatprep.subr.bf16.mxu0 0
        %505 = vmatpush1.bf16.msra.mxu0 0
        %506 = vmatprep.subr.bf16.mxu0 0
        %507 = vmatpush1.bf16.msra.mxu0 0
        %508 = vmatprep.subr.bf16.mxu0 0
        %509 = vmatpush1.bf16.msra.mxu0 0
        %510 = vmatprep.subr.bf16.mxu0 0
        %511 = vmatpush1.bf16.msra.mxu0 0
        %512 = vmatprep.subr.bf16.mxu0 0
        %513 = vmatpush1.bf16.msra.mxu0 0
        %514 = vmatprep.subr.bf16.mxu0 0
        %515 = vmatpush1.bf16.msra.mxu0 0
        %516 = vmatprep.subr.bf16.mxu0 %v497
        %517 = vmatpush1.bf16.msra.mxu0 %v494
        %518 = vmatprep.subr.bf16.mxu0 0
        %519 = vmatpush2.bf16.msra.mxu0 0
        %520 = vmatprep.subr.bf16.mxu0 0
        %521 = vmatpush2.bf16.msra.mxu0 0
        %522 = vmatprep.subr.bf16.mxu0 0
        %523 = vmatpush2.bf16.msra.mxu0 0
        %524 = vmatprep.subr.bf16.mxu0 0
        %525 = vmatpush2.bf16.msra.mxu0 0
        %526 = vmatprep.subr.bf16.mxu0 0
        %527 = vmatpush2.bf16.msra.mxu0 0
        %528 = vmatprep.subr.bf16.mxu0 0
        %529 = vmatpush2.bf16.msra.mxu0 0
        %530 = vmatprep.subr.bf16.mxu0 0
        %531 = vmatpush2.bf16.msra.mxu0 0
        %532 = vmatprep.subr.bf16.mxu0 0
        %533 = vmatpush2.bf16.msra.mxu0 0
        %534 = vmatprep.mubr.bf16.mxu0 0
        %535 = vmatmul.mubr.bf16.gmra.mxu0 %v490
        %v536 = vpop.f32.mrf.mxu0
        %v537 = vadd.f32 %v486, %v536
        %v538 = vpop.f32.mrf.mxu0
        %v539 = vadd.f32 %v486, %v538
        %v540 = vpop.f32.mrf.mxu0
        %v541 = vpop.f32.mrf.mxu0
        %542 = vdwg.mxu0
        %543 = vmatprep.subr.bf16.mxu0 0
        %544 = vmatpush1.bf16.msra.mxu0 0
        %545 = vmatprep.subr.bf16.mxu0 0
        %546 = vmatpush1.bf16.msra.mxu0 0
        %547 = vmatprep.subr.bf16.mxu0 0
        %548 = vmatpush1.bf16.msra.mxu0 0
        %549 = vmatprep.subr.bf16.mxu0 0
        %550 = vmatpush1.bf16.msra.mxu0 0
        %551 = vmatprep.subr.bf16.mxu0 0
        %552 = vmatpush1.bf16.msra.mxu0 0
        %553 = vmatprep.subr.bf16.mxu0 0
        %554 = vmatpush1.bf16.msra.mxu0 0
        %555 = vmatprep.subr.bf16.mxu0 0
        %556 = vmatpush1.bf16.msra.mxu0 0
        %557 = vmatprep.subr.bf16.mxu0 0
        %558 = vmatpush1.bf16.msra.mxu0 %v500
        %559 = vmatprep.subr.bf16.mxu0 0
        %560 = vmatpush2.bf16.msra.mxu0 0
        %561 = vmatprep.subr.bf16.mxu0 0
        %562 = vmatpush2.bf16.msra.mxu0 0
        %563 = vmatprep.subr.bf16.mxu0 0
        %564 = vmatpush2.bf16.msra.mxu0 0
        %565 = vmatprep.subr.bf16.mxu0 0
        %566 = vmatpush2.bf16.msra.mxu0 0
        %567 = vmatprep.subr.bf16.mxu0 0
        %568 = vmatpush2.bf16.msra.mxu0 0
        %569 = vmatprep.subr.bf16.mxu0 0
        %570 = vmatpush2.bf16.msra.mxu0 0
        %571 = vmatprep.subr.bf16.mxu0 0
        %572 = vmatpush2.bf16.msra.mxu0 0
        %573 = vmatprep.subr.bf16.mxu0 0
        %574 = vmatpush2.bf16.msra.mxu0 0
        %575 = vmatprep.mubr.bf16.mxu0 0
        %576 = vmatmul.mubr.bf16.gmra.mxu0 %v490
        %v577 = vpop.f32.mrf.mxu0
        %v578 = vadd.f32 %v486, %v577
        %v579 = vpop.f32.mrf.mxu0
        %v580 = vpop.f32.mrf.mxu0
        %v581 = vpop.f32.mrf.mxu0
        %582 = vdwg.mxu0
        %vm583 = vcmp.gt.f32.partialorder %v537, 0.0
        %vm584 = vcmp.gt.f32.partialorder %v539, 0.0
        %vm585 = vcmp.gt.f32.partialorder %v578, 0.0
        %v586 = vmul.f32 %v537, 0.01
        %v587 = vmul.f32 %v539, 0.01
        %v588 = vmul.f32 %v578, 0.01
        %v589 = vsel %vm583, %v537, %v586
        %v590 = vsel %vm584, %v539, %v587
        %v591 = vsel %vm585, %v578, %v588
        %592 = vst [vmem:[%s217] sm:$0xff] %v589
        %593 = vst [vmem:[%s217 + $0x8] sm:$0xff] %v590
        %594 = vst [vmem:[%s217 + $0x10] sm:$0xff] %v591
        %s595 = sand.u32 %s137, 1
        %s596 = scalar_lea.sflag [#allocation3], %s595
        %s597 = sand.u32 %s137, 1
        %s598 = smul.addr %s597, 24
        %s599 = scalar_lea.vmem [#allocation2], %s598
        // Predicated region
        $region41: #{tpu_custom_call.1} parent=39 // pred_check
          %p600 = pneg %p147
        $region42: #{tpu_custom_call.1} parent=39 // pred_check_branch
          %602 = sbr.rel (%p600) target = $region44
        $region43: #{tpu_custom_call.1} parent=39 // pred_region
          %s604 = ssub.s32 384, 384
          %605 = vsyncadd %s596, %s604
          %s606 = smul.addr %s19, 3
          %s607 = smul.addr %s606, 128
          %s608 = scalar_lea.hbm %s5, %s607
          %s610 = sshll.u32 %s599, 4
          %s611 = int_to_ptr.vmem [resolvable:$true] %s610
          %613 = dma.vmem_to_hbm [thread:$0]  %s611, 384, %s608, %s596
        $region44: #{tpu_custom_call.1} parent=39 // pred_fallthru
          _
      $region40: #{tpu_custom_call.1} parent=5 // pred_fallthru
        _
      %p614 = scmp.le.s32.totalorder 2, %s14
      // Predicated region
      $region45: #{tpu_custom_call.1} parent=5 // pred_check
        %p615 = pneg %p614
      $region46: #{tpu_custom_call.1} parent=5 // pred_check_branch
        %617 = sbr.rel (%p615) target = $region48
      $region47: #{tpu_custom_call.1} parent=5 // pred_region
        %s618 = ssub.s32 %s14, 2
        // Predicated region
        $region49: #{tpu_custom_call.1} parent=47 // pred_check
          %p619 = pneg %p153
        $region50: #{tpu_custom_call.1} parent=47 // pred_check_branch
          %621 = sbr.rel (%p619) target = $region52
        $region51: #{tpu_custom_call.1} parent=47 // pred_region
          %s622 = sand.u32 %s138, 1
          %s623 = scalar_lea.sflag [#allocation3], %s622
          %s624 = sand.u32 %s138, 1
          %s625 = smul.addr %s624, 24
          %s626 = scalar_lea.vmem [#allocation2], %s625
          %627 = dma.done %s623, 384
        $region52: #{tpu_custom_call.1} parent=47 // pred_fallthru
          _
      $region48: #{tpu_custom_call.1} parent=5 // pred_fallthru
        _
    $region6: #{tpu_custom_call.1} parent=1 // loop_footer
      %s18 = sadd.s32 1, %s14
    $region7: #{tpu_custom_call.1} parent=1 // loop_footer_branch
      %13 = sbr.rel target = $region3
    $region8: #{tpu_custom_call.1} parent=1 // loop_exit
      _
    %628 = vsyncpa [#allocation3], 1
    %s629 = scalar_lea.sflag [#allocation3], 1
    %630 = vsyncpa %s629, 1

</llo_original>
